<compile_context>
chip_gen: v7x
topology: tpu7x:2x2x1
jax: 0.10.0
libtpu: 0.0.40
codegen_flags: <defaults>
</compile_context>

<pallas_src>
import functools

import jax
import jax.numpy as jnp
from jax.experimental import pallas as pl
from jax.experimental.pallas import tpu as pltpu


def _bce_with_logits(x, y):
    # Numerically stable BCE-with-logits (same formulation PyTorch uses).
    return jnp.maximum(x, 0.0) - x * y + jnp.log1p(jnp.exp(-jnp.abs(x)))


def _nce_partial_kernel(logits_ref, target_ref, out_ref, *, n_rows, row_tile, needs_mask):
    """One row tile: BCE-with-logits reduced over rows to a lane-dense partial."""
    x = logits_ref[...].astype(jnp.float32)
    y = target_ref[...].astype(jnp.float32)
    if needs_mask:
        row0 = pl.program_id(0) * row_tile
        rid = jax.lax.broadcasted_iota(jnp.int32, x.shape, 0) + row0
        valid = rid < n_rows
        x = jnp.where(valid, x, 0.0)   # keep garbage away from exp/log1p
        y = jnp.where(valid, y, 0.0)
    loss = _bce_with_logits(x, y)
    if needs_mask:
        loss = jnp.where(valid, loss, 0.0)
    # Reduce only over the row (sublane) axis; keep lanes so the store is lane-dense.
    # The tiny cross-tile / cross-lane reduce is left to XLA outside the kernel.
    out_ref[0] = jnp.sum(loss, axis=0, keepdims=True)


def _nce_partial_onehot_kernel(logits_ref, out_ref, *, n_rows, row_tile, needs_mask,
                               positive_col):
    """Fast path for one-hot 0/1 targets: the target stream is never read from HBM."""
    x = logits_ref[...].astype(jnp.float32)
    col = jax.lax.broadcasted_iota(jnp.int32, x.shape, 1)
    y = (col == positive_col).astype(jnp.float32)
    if needs_mask:
        row0 = pl.program_id(0) * row_tile
        rid = jax.lax.broadcasted_iota(jnp.int32, x.shape, 0) + row0
        valid = rid < n_rows
        x = jnp.where(valid, x, 0.0)
        y = jnp.where(valid, y, 0.0)
    loss = _bce_with_logits(x, y)
    if needs_mask:
        loss = jnp.where(valid, loss, 0.0)
    out_ref[0] = jnp.sum(loss, axis=0, keepdims=True)


def _round_up(x, m):
    return ((int(x) + m - 1) // m) * m


def _choose_row_tile(n_rows, k_cols, dtypes, target_bytes=2 << 20):
    """~target_bytes per input block, dtype-native sublane multiple, >=2 tiles if possible."""
    mult = max(max(1, 32 // jnp.dtype(d).itemsize) for d in dtypes)
    widest = max(jnp.dtype(d).itemsize for d in dtypes)
    rows = max(mult, (target_bytes // max(1, k_cols * widest)) // mult * mult)
    if n_rows > mult:
        # v7x has 2 TensorCores; keep the "parallel" grid at >= 2 balanced tiles.
        rows = min(rows, _round_up(pl.cdiv(n_rows, 2), mult))
    rows = min(rows, _round_up(n_rows, mult))
    return int(max(mult, rows))


def nce_loss(logits, nce_target=None, size_average=True, row_tile=None, positive_col=None):
    """Pallas forward pass of the nce_loss module.

    positive_col: optional int.  If given, targets are assumed to be the one-hot
    row target[:, positive_col] == 1 (classic NCE layout) and the target tensor
    is never read (halves HBM traffic).  Otherwise nce_target is required.
    """
    assert logits.ndim == 2
    N, Kp1 = logits.shape
    one_hot = positive_col is not None
    if not one_hot:
        assert nce_target is not None and nce_target.shape == logits.shape

    dtypes = (logits.dtype,) if one_hot else (logits.dtype, nce_target.dtype)
    mult = max(max(1, 32 // jnp.dtype(d).itemsize) for d in dtypes)
    if row_tile is None:
        row_tile = _choose_row_tile(N, Kp1, dtypes)
    row_tile = max(mult, (int(row_tile) // mult) * mult)

    num_tiles = int(pl.cdiv(N, row_tile))
    needs_mask = (N % row_tile) != 0

    compiler_params = pltpu.CompilerParams(
        dimension_semantics=("parallel",),
        vmem_limit_bytes=48 * 1024 * 1024,
    )
    out_shape = jax.ShapeDtypeStruct((num_tiles, 1, Kp1), jnp.float32)
    out_spec = pl.BlockSpec((1, 1, Kp1), lambda i: (i, 0, 0))
    in_spec = pl.BlockSpec((row_tile, Kp1), lambda i: (i, 0))

    if one_hot:
        kernel = functools.partial(
            _nce_partial_onehot_kernel, n_rows=N, row_tile=row_tile,
            needs_mask=needs_mask, positive_col=int(positive_col))
        partials = pl.pallas_call(
            kernel, out_shape=out_shape, grid=(num_tiles,),
            in_specs=[in_spec], out_specs=out_spec,
            compiler_params=compiler_params,
        )(logits)
    else:
        kernel = functools.partial(
            _nce_partial_kernel, n_rows=N, row_tile=row_tile, needs_mask=needs_mask)
        partials = pl.pallas_call(
            kernel, out_shape=out_shape, grid=(num_tiles,),
            in_specs=[in_spec, in_spec], out_specs=out_spec,
            compiler_params=compiler_params,
        )(logits, nce_target)

    # Epilogue: a few-KB reduce + optional /N is cheaper as a plain XLA fused
    # reduce than a second Mosaic custom call.
    total = jnp.sum(partials)
    if size_average:
        total = total / jnp.float32(N)
    return total


def _reference(logits, nce_target, size_average=True):
    x = logits.astype(jnp.float32)
    y = nce_target.astype(jnp.float32)
    loss = jnp.maximum(x, 0.0) - x * y + jnp.log1p(jnp.exp(-jnp.abs(x)))
    s = jnp.sum(loss)
    if size_average:
        s = s / logits.shape[0]
    return s


if __name__ == "__main__":
    key = jax.random.PRNGKey(0)
    k1, k2, k3 = jax.random.split(key, 3)

    # Case 1: classic NCE layout — N=16 rows, 1 true (col 0) + 127 noise columns.
    N1, K1 = 16, 128
    logits1 = jax.random.normal(k1, (N1, K1), dtype=jnp.float32) * 2.0
    target1 = jnp.concatenate(
        [jnp.ones((N1, 1)), jnp.zeros((N1, K1 - 1))], axis=1
    ).astype(jnp.bfloat16)  # 0/1 is exact in bf16 -> halves the target HBM stream

    out1 = jax.block_until_ready(nce_loss(logits1, target1, size_average=True))
    ref1 = _reference(logits1, target1, size_average=True)
    assert jnp.allclose(out1, ref1, rtol=1e-5, atol=1e-4), (out1, ref1)

    # Case 1b: same data via the one-hot fast path (target stream never read).
    out1b = jax.block_until_ready(nce_loss(logits1, size_average=True, positive_col=0))
    assert jnp.allclose(out1b, ref1, rtol=1e-5, atol=1e-4), (out1b, ref1)

    # Case 2: ragged N (in-kernel tail masking), non-128 lane width, multi-tile
    # parallel grid, arbitrary float targets, no size averaging.
    N2, K2 = 50, 96
    logits2 = jax.random.normal(k2, (N2, K2), dtype=jnp.float32)
    target2 = jax.random.uniform(k3, (N2, K2), dtype=jnp.float32)

    out2 = jax.block_until_ready(
        nce_loss(logits2, target2, size_average=False, row_tile=16))
    ref2 = _reference(logits2, target2, size_average=False)
    assert jnp.allclose(out2, ref2, rtol=1e-5, atol=1e-4), (out2, ref2)

    # Case 3: ragged N with auto-chosen tile (>=2 tiles path) and size averaging.
    N3, K3 = 200, 128
    logits3 = jax.random.normal(k1, (N3, K3), dtype=jnp.float32)
    target3 = (jax.random.uniform(k2, (N3, K3)) < 0.1).astype(jnp.float32)
    out3 = jax.block_until_ready(nce_loss(logits3, target3, size_average=True))
    ref3 = _reference(logits3, target3, size_average=True)
    assert jnp.allclose(out3, ref3, rtol=1e-5, atol=1e-4), (out3, ref3)

    print("KERNEL_OK")
</pallas_src>

<mosaic_0001>
module attributes {stable_mosaic.version = 11 : i64} {
  func.func @_nce_partial_kernel(%arg0: i32, %arg1: memref<16x128xf32, #tpu.memory_space<vmem>>, %arg2: memref<16x128xbf16, #tpu.memory_space<vmem>>, %arg3: memref<1x1x128xf32, #tpu.memory_space<vmem>>) attributes {dimension_semantics = [#tpu.dimension_semantics<parallel>], iteration_bounds = array<i64: 1>, scalar_prefetch = 0 : i64, scratch_operands = 0 : i64, tpu.core_type = #tpu.core_type<tc>, window_params = [{transform_indices = @transform_0, window_bounds = array<i64: 16, 128>}, {transform_indices = @transform_1, window_bounds = array<i64: 16, 128>}, {transform_indices = @transform_2, window_bounds = array<i64: 1, 1, 128>}]} {
    %c0 = arith.constant 0 : index
    %c0_0 = arith.constant 0 : index
    %0 = vector.load %arg1[%c0, %c0_0] : memref<16x128xf32, #tpu.memory_space<vmem>>, vector<16x128xf32>
    %c0_1 = arith.constant 0 : index
    %c0_2 = arith.constant 0 : index
    %1 = vector.load %arg2[%c0_1, %c0_2] : memref<16x128xbf16, #tpu.memory_space<vmem>>, vector<16x128xbf16>
    %2 = arith.extf %1 : vector<16x128xbf16> to vector<16x128xf32>
    %cst = arith.constant 0.000000e+00 : f32
    %3 = vector.broadcast %cst : f32 to vector<16x128xf32>
    %4 = arith.maximumf %0, %3 : vector<16x128xf32>
    %5 = arith.mulf %0, %2 : vector<16x128xf32>
    %6 = arith.subf %4, %5 : vector<16x128xf32>
    %7 = math.absf %0 : vector<16x128xf32>
    %cst_3 = arith.constant 0.000000e+00 : f32
    %8 = vector.broadcast %cst_3 : f32 to vector<16x128xf32>
    %9 = arith.subf %8, %7 : vector<16x128xf32>
    %10 = math.exp %9 : vector<16x128xf32>
    %11 = math.log1p %10 : vector<16x128xf32>
    %12 = arith.addf %6, %11 : vector<16x128xf32>
    %cst_4 = arith.constant dense<0.000000e+00> : vector<128xf32>
    %13 = vector.multi_reduction <add>, %12, %cst_4 [0] : vector<16x128xf32> to vector<128xf32>
    %14 = vector.shape_cast %13 : vector<128xf32> to vector<1x128xf32>
    %c0_5 = arith.constant 0 : index
    %c0_6 = arith.constant 0 : index
    %c0_7 = arith.constant 0 : index
    %15 = vector.load %arg3[%c0_5, %c0_6, %c0_7] : memref<1x1x128xf32, #tpu.memory_space<vmem>>, vector<1x1x128xf32>
    %16 = vector.shape_cast %15 : vector<1x1x128xf32> to vector<1x128xf32>
    %17 = vector.shape_cast %14 : vector<1x128xf32> to vector<1x1x128xf32>
    tpu.vector_store %arg3[%c0_5, %c0_6, %c0_7], %17 {strides = array<i32>} : memref<1x1x128xf32, #tpu.memory_space<vmem>>, vector<1x1x128xf32>,
    return
  }
  func.func @transform_0(%arg0: i32) -> (i32, i32) {
    %c0_i32 = arith.constant 0 : i32
    %c0_i32_0 = arith.constant 0 : i32
    return %arg0, %c0_i32 : i32, i32
  }
  func.func @transform_1(%arg0: i32) -> (i32, i32) {
    %c0_i32 = arith.constant 0 : i32
    %c0_i32_0 = arith.constant 0 : i32
    return %arg0, %c0_i32 : i32, i32
  }
  func.func @transform_2(%arg0: i32) -> (i32, i32, i32) {
    %c0_i32 = arith.constant 0 : i32
    %c0_i32_0 = arith.constant 0 : i32
    %c0_i32_1 = arith.constant 0 : i32
    return %arg0, %c0_i32, %c0_i32_0 : i32, i32, i32
  }
}

</mosaic_0001>

<llo_original>
// kernel: tpu_custom_call.1
$region0: #{tpu_custom_call.1}
  #allocation0 [shape = 'u32[]', space=smem, size = 0x4, offset = 0x4, fixed_abs, tag = 'smem constant byte address 0x4 - core index']
  #allocation1 [shape = 'u32[144,128]{1,0:T(1,128)}', space=vmem, size = 0x12000, scoped, tag = 'internal scratch']
  %s0 = inlined_call_operand.hbm [shape: f32[16,128], index: 0, kind: input, shape index: {}]
  %s1 = inlined_call_operand.hbm [shape: bf16[16,128], index: 1, kind: input, shape index: {}]
  %s2 = inlined_call_operand.hbm [shape: f32[1,1,128], index: 2, kind: output, shape index: {}]
  %s3 = sld [smem:[#allocation0]]
  $region26: #{tpu_custom_call.1} parent=0
    _
  %s5 = ssub.s32 1, %s3
  %s6 = scalar_select 0, %s5, %s3
  $region1: #{tpu_custom_call.1} parent=0
    #allocation2 [shape = 'u8[8192]{0}', space=vmem, size = 0x2000, scoped, tag = 'input window, operand 0, single buffered']
    #allocation3 [shape = 's32[1]{0}', space=sflag, size = 0x4, scoped, tag = 'scoped memory for tpu_custom_call.1']
    #allocation4 [shape = 's32[1]{0}', space=sflag, size = 0x4, scoped, tag = 'scoped memory for tpu_custom_call.1']
    #allocation5 [shape = 'u8[4096]{0}', space=vmem, size = 0x1000, scoped, tag = 'input window, operand 1, single buffered']
    #allocation6 [shape = 's32[1]{0}', space=sflag, size = 0x4, scoped, tag = 'scoped memory for tpu_custom_call.1']
    #allocation7 [shape = 'u8[512]{0}', space=vmem, size = 0x400, scoped, tag = 'output window, operand 0, single buffered']
    %7 = vsyncpa [#allocation3], 0
    %8 = vsyncpa [#allocation6], 0
    %9 = vsyncpa [#allocation4], 0
    // Predicated region
    $region2: #{tpu_custom_call.1} parent=1 // pred_check
      _
    $region3: #{tpu_custom_call.1} parent=1 // pred_check_branch
      %11 = sbr.rel (0) target = $region5
    $region4: #{tpu_custom_call.1} parent=1 // pred_region
      %s13 = ssub.s32 256, 256
      %14 = vsyncadd [#allocation3], %s13
      %s15 = sshll.u32 [#allocation2], 4
      %s16 = int_to_ptr.vmem [resolvable:$true] %s15
      %21 = dma.hbm_to_vmem [thread:$0]  %s0, 256, %s16, [#allocation3], 128, 128, 8
    $region5: #{tpu_custom_call.1} parent=1 // pred_fallthru
      _
    // Predicated region
    $region6: #{tpu_custom_call.1} parent=1 // pred_check
      _
    $region7: #{tpu_custom_call.1} parent=1 // pred_check_branch
      %23 = sbr.rel (0) target = $region9
    $region8: #{tpu_custom_call.1} parent=1 // pred_region
      %s25 = ssub.s32 128, 128
      %26 = vsyncadd [#allocation6], %s25
      %s27 = sshll.u32 [#allocation5], 4
      %s28 = int_to_ptr.vmem [resolvable:$true] %s27
      %33 = dma.hbm_to_vmem [thread:$0]  %s1, 128, %s28, [#allocation6], 64, 64, 4
    $region9: #{tpu_custom_call.1} parent=1 // pred_fallthru
      _
    // Predicated region
    $region10: #{tpu_custom_call.1} parent=1 // pred_check
      _
    $region11: #{tpu_custom_call.1} parent=1 // pred_check_branch
      %35 = sbr.rel (0) target = $region13
    $region12: #{tpu_custom_call.1} parent=1 // pred_region
      %36 = dma.done [#allocation3], 256
    $region13: #{tpu_custom_call.1} parent=1 // pred_fallthru
      _
    // Predicated region
    $region14: #{tpu_custom_call.1} parent=1 // pred_check
      _
    $region15: #{tpu_custom_call.1} parent=1 // pred_check_branch
      %38 = sbr.rel (0) target = $region17
    $region16: #{tpu_custom_call.1} parent=1 // pred_region
      %39 = dma.done [#allocation6], 128
    $region17: #{tpu_custom_call.1} parent=1 // pred_fallthru
      _
    %v40 = vld [vmem:[#allocation2] sm:$0xff]
    %v41 = vld [vmem:[#allocation2 + $0x8] sm:$0xff]
    %v42 = vld [vmem:[#allocation5] sm:$0xf]
    %v43 = vld [vmem:[#allocation5 + $0x4] sm:$0xf]
    %v44 = vunpack.c.l.bf16 %v42
    %v45 = vunpack.c.l.bf16 %v43
    %v46 = vmax.f32 %v40, 0.0
    %v47 = vmax.f32 %v41, 0.0
    %v48 = vmul.f32 %v40, %v44
    %v49 = vmul.f32 %v41, %v45
    %v50 = vsub.f32 %v46, %v48
    %v51 = vsub.f32 %v47, %v49
    %v52 = vand.u32 2147483647, %v40
    %v53 = vand.u32 2147483647, %v41
    %v54 = vsub.f32 0.0, %v52
    %v55 = vsub.f32 0.0, %v53
    %v56 = vmul.f32 %v54, 1.442695
    %v57 = vpow.pop %v56
    %v58 = vmul.f32 %v55, 1.442695
    %v59 = vpow.pop %v58
    %v60 = vadd.f32 %v57, 1.0
    %v61 = vlog2.pop %v60
    %v62 = vmul.f32 %v61, 0.6931472
    %v63 = vmul.f32 -0.5, %v57
    %v64 = vadd.f32 %v63, 1.0
    %v65 = vmul.f32 %v64, %v57
    %v66 = vand.u32 2147483647, %v57
    %vm67 = vcmp.lt.f32.partialorder %v66, 0.0004427343
    %v68 = vsel %vm67, %v65, %v62
    %v69 = vadd.f32 %v59, 1.0
    %v70 = vlog2.pop %v69
    %v71 = vmul.f32 %v70, 0.6931472
    %v72 = vmul.f32 -0.5, %v59
    %v73 = vadd.f32 %v72, 1.0
    %v74 = vmul.f32 %v73, %v59
    %v75 = vand.u32 2147483647, %v59
    %vm76 = vcmp.lt.f32.partialorder %v75, 0.0004427343
    %v77 = vsel %vm76, %v74, %v71
    %v78 = vadd.f32 %v50, %v68
    %v79 = vadd.f32 %v51, %v77
    %v80 = vadd.f32 %v78, %v79
    %v81 = vrot.slane %v80, 4
    %v82 = vadd.f32 %v80, %v81
    %v83 = vrot.slane %v82, 2
    %v84 = vadd.f32 %v82, %v83
    %v85 = vrot.slane %v84, 1
    %v86 = vadd.f32 %v84, %v85
    %87 = vst [vmem:[#allocation7] sm:$0x1] %v86
    // Predicated region
    $region18: #{tpu_custom_call.1} parent=1 // pred_check
      _
    $region19: #{tpu_custom_call.1} parent=1 // pred_check_branch
      %89 = sbr.rel (0) target = $region21
    $region20: #{tpu_custom_call.1} parent=1 // pred_region
      %s91 = ssub.s32 16, 16
      %92 = vsyncadd [#allocation4], %s91
      %s94 = sshll.u32 [#allocation7], 4
      %s95 = int_to_ptr.vmem [resolvable:$true] %s94
      %97 = dma.vmem_to_hbm [thread:$0]  %s95, 16, %s2, [#allocation4]
    $region21: #{tpu_custom_call.1} parent=1 // pred_fallthru
      _
    // Predicated region
    $region22: #{tpu_custom_call.1} parent=1 // pred_check
      _
    $region23: #{tpu_custom_call.1} parent=1 // pred_check_branch
      %99 = sbr.rel (0) target = $region25
    $region24: #{tpu_custom_call.1} parent=1 // pred_region
      %100 = dma.done [#allocation4], 16
    $region25: #{tpu_custom_call.1} parent=1 // pred_fallthru
      _
    %101 = vsyncpa [#allocation3], 1
    %102 = vsyncpa [#allocation6], 1
    %103 = vsyncpa [#allocation4], 1

</llo_original>
